<compile_context>
chip_gen: v7x
topology: tpu7x:2x2x1
jax: 0.10.0
libtpu: 0.0.40
codegen_flags: <defaults>
</compile_context>

<pallas_src>
import jax
import jax.numpy as jnp
from jax.experimental import pallas as pl
from jax.experimental.pallas import tpu as pltpu


# ----------------------------------------------------------------------------
# Fused kernel: encode -> decode of BOTH sub-AEs for a tile of batch elements.
# Activations are (C, H*W): H*W sits on the 128-lane axis (lane-dense stores).
# ----------------------------------------------------------------------------
def _ae_fused_kernel(x_ref, we_ref, wd_ref, o_ref):
    # x_ref : (TB, C_tot+1, HW)  -- vis+touch channels + a ones row (bias column input)
    # we_ref: (2E+1, C_tot+1)    -- block-diag encode weights, biases folded,
    #                               last row regenerates the ones row after ReLU
    # wd_ref: (C_out, 2E+1)      -- block-diag decode weights, biases folded
    # o_ref : (TB, C_out, HW)
    we = we_ref[...].astype(jnp.float32)
    wd = wd_ref[...].astype(jnp.float32)
    tb = x_ref.shape[0]
    for b in range(tb):  # static unroll inside ONE grid step: no per-step overhead
        x = x_ref[b].astype(jnp.float32)                       # (C_tot+1, HW)
        z = jnp.maximum(
            jnp.dot(we, x, preferred_element_type=jnp.float32), 0.0)   # (2E+1, HW)
        y = jnp.dot(wd, z, preferred_element_type=jnp.float32)         # (C_out, HW)
        y = 0.5 * jnp.tanh(0.5 * y) + 0.5                      # sigmoid, single EUP op
        o_ref[b] = y.astype(o_ref.dtype)


def _ae_forward_fused(x_aug, w_enc, w_dec, out_dtype, batch_tile=None):
    """x_aug: (B, C_tot+1, HW) -> (B, C_out, HW) reconstructed channels."""
    b, c_aug, hw = x_aug.shape
    n_lat = w_enc.shape[0]
    c_out = w_dec.shape[0]

    # Single step for small B; TB-sized batch tiles for large B (keeps both v7x TCs
    # busy via the "parallel" axis without degenerating into 1-element micro-steps).
    tb = b if (batch_tile is None or batch_tile >= b) else batch_tile
    pad = (-b) % tb
    if pad:
        x_aug = jnp.pad(x_aug, ((0, pad), (0, 0), (0, 0)))
    bp = b + pad

    out = pl.pallas_call(
        _ae_fused_kernel,
        out_shape=jax.ShapeDtypeStruct((bp, c_out, hw), out_dtype),
        grid_spec=pltpu.PrefetchScalarGridSpec(
            num_scalar_prefetch=0,
            grid=(bp // tb,),
            in_specs=[
                pl.BlockSpec((tb, c_aug, hw), lambda i: (i, 0, 0)),
                pl.BlockSpec((n_lat, c_aug), lambda i: (0, 0)),   # weights resident
                pl.BlockSpec((c_out, n_lat), lambda i: (0, 0)),
            ],
            out_specs=pl.BlockSpec((tb, c_out, hw), lambda i: (i, 0, 0)),
        ),
        compiler_params=pltpu.CompilerParams(
            dimension_semantics=("parallel",)),
    )(x_aug, w_enc, w_dec)
    return out[:b] if pad else out


# ----------------------------------------------------------------------------
# Synthetic pointwise (1x1-conv) sub-autoencoder parameters.
# ----------------------------------------------------------------------------
class PointwiseAE:
    def __init__(self, key, c_in, c_enc):
        k1, k2, k3, k4 = jax.random.split(key, 4)
        s_e = 1.0 / jnp.sqrt(c_in)
        s_d = 1.0 / jnp.sqrt(c_enc)
        self.c_in, self.c_enc = c_in, c_enc
        self.params = {
            "we": (jax.random.normal(k1, (c_enc, c_in)) * s_e).astype(jnp.float32),
            "be": (jax.random.normal(k2, (c_enc,)) * s_e).astype(jnp.float32),
            "wd": (jax.random.normal(k3, (c_in, c_enc)) * s_d).astype(jnp.float32),
            "bd": (jax.random.normal(k4, (c_in,)) * s_d).astype(jnp.float32),
        }


# ----------------------------------------------------------------------------
# AutoEncoderSimple.forward (action=None path), PyTorch semantics.
# concat(ev, el) -> split at m = (E+E)//2 is an identity ONLY because both latent
# widths are equal (asserted); relaxing that assert would make this kernel wrong.
# ----------------------------------------------------------------------------
class AutoEncoderSimple:
    def __init__(self, vis_ae=None, touch_ae=None, action=False, only_tactile=False):
        assert vis_ae.c_enc == touch_ae.c_enc, \
            "fused kernel requires equal latent widths (the m-split identity)"
        self.vis_ae = vis_ae
        self.touch_ae = touch_ae
        self.only_tactile = only_tactile

        e = vis_ae.c_enc
        c_vis, c_touch = vis_ae.c_in, touch_ae.c_in
        c_tot = c_vis + c_touch
        self.c_vis, self.c_touch, self.e = c_vis, c_touch, e

        # Stacked block-diagonal encode matrix with bias folded: (2E+1, C_tot+1).
        vp, tp = vis_ae.params, touch_ae.params
        w_enc = jnp.zeros((2 * e + 1, c_tot + 1), jnp.float32)
        w_enc = w_enc.at[:e, :c_vis].set(vp["we"])
        w_enc = w_enc.at[e:2 * e, c_vis:c_tot].set(tp["we"])
        w_enc = w_enc.at[:e, c_tot].set(vp["be"])
        w_enc = w_enc.at[e:2 * e, c_tot].set(tp["be"])
        w_enc = w_enc.at[2 * e, c_tot].set(1.0)   # -> ReLU(1)=1: ones row in the latent
        self.w_enc = w_enc

        # Stacked block-diagonal decode matrix with bias folded: (C_tot, 2E+1).
        w_dec = jnp.zeros((c_tot, 2 * e + 1), jnp.float32)
        w_dec = w_dec.at[:c_vis, :e].set(vp["wd"])
        w_dec = w_dec.at[c_vis:, e:2 * e].set(tp["wd"])
        w_dec = w_dec.at[:c_vis, 2 * e].set(vp["bd"])
        w_dec = w_dec.at[c_vis:, 2 * e].set(tp["bd"])
        self.w_dec_full = w_dec
        self.w_dec_touch = w_dec[c_vis:]          # tactile-only: vision decode skipped

    def forward(self, v_t0, l_t0, action=None, batch_tile=None):
        if action is not None:
            # TODO(synk): action branch slices channels 0:2044 / 0:2045 and tiles the
            # action map; requires >=2044-channel latents (and K/N-tiled or bf16 weights
            # to fit v7x's 64 MiB VMEM) — not meaningful at small synthetic shapes.
            raise NotImplementedError("action branch not supported at small synthetic shapes")

        bsz, c_vis, h, w = v_t0.shape
        _, c_touch, _, _ = l_t0.shape
        hw = h * w
        # NCHW -> (B, C, H*W) is a pure reshape; concat of both modalities + a ones
        # row (bias input) is a few KiB of HBM-side plumbing.
        v3d = v_t0.reshape(bsz, c_vis, hw)
        l3d = l_t0.reshape(bsz, c_touch, hw)
        ones = jnp.ones((bsz, 1, hw), v_t0.dtype)
        x_aug = jnp.concatenate((v3d, l3d, ones), axis=1)

        w_dec = self.w_dec_touch if self.only_tactile else self.w_dec_full
        y = _ae_forward_fused(x_aug, self.w_enc, w_dec,
                              out_dtype=v_t0.dtype, batch_tile=batch_tile)

        if self.only_tactile:
            return y.reshape(bsz, c_touch, h, w)
        v_tx = y[:, :c_vis].reshape(bsz, c_vis, h, w)
        l_tx = y[:, c_vis:].reshape(bsz, c_touch, h, w)
        return (v_tx, l_tx)


# ----------------------------------------------------------------------------
# Pure-JAX reference (mirrors the PyTorch forward incl. concat/split).
# ----------------------------------------------------------------------------
def _reference_forward(v_t0, l_t0, vis_p, touch_p):
    def enc(x, p):
        return jnp.maximum(jnp.einsum("ec,bchw->behw", p["we"], x)
                           + p["be"][None, :, None, None], 0.0)

    def dec(z, p):
        return jax.nn.sigmoid(jnp.einsum("ce,behw->bchw", p["wd"], z)
                              + p["bd"][None, :, None, None])

    ev = enc(v_t0, vis_p)
    el = enc(l_t0, touch_p)
    es = jnp.concatenate((ev, el), axis=1)
    m = es.shape[1] // 2
    ev_tx, el_tx = es[:, :m], es[:, m:]
    return dec(ev_tx, vis_p), dec(el_tx, touch_p)


if __name__ == "__main__":
    key = jax.random.PRNGKey(0)
    k_vae, k_tae, k_v, k_l = jax.random.split(key, 4)

    B, H, W = 2, 16, 16
    C_VIS, C_TOUCH, E = 4, 4, 32  # equal latent widths so the m-split round-trips

    vis_ae = PointwiseAE(k_vae, C_VIS, E)
    touch_ae = PointwiseAE(k_tae, C_TOUCH, E)
    model = AutoEncoderSimple(vis_ae, touch_ae, only_tactile=False)
    model_tac = AutoEncoderSimple(vis_ae, touch_ae, only_tactile=True)

    v_t0 = jax.random.normal(k_v, (B, C_VIS, H, W), dtype=jnp.float32)
    l_t0 = jax.random.normal(k_l, (B, C_TOUCH, H, W), dtype=jnp.float32)

    v_tx, l_tx = model.forward(v_t0, l_t0)
    l_only = model_tac.forward(v_t0, l_t0)
    jax.block_until_ready((v_tx, l_tx, l_only))

    assert v_tx.shape == (B, C_VIS, H, W) and l_tx.shape == (B, C_TOUCH, H, W)
    assert l_only.shape == (B, C_TOUCH, H, W)
    assert v_tx.dtype == v_t0.dtype and l_tx.dtype == l_t0.dtype

    v_ref, l_ref = _reference_forward(v_t0, l_t0, vis_ae.params, touch_ae.params)
    assert jnp.allclose(v_tx, v_ref, atol=1e-5, rtol=1e-5)
    assert jnp.allclose(l_tx, l_ref, atol=1e-5, rtol=1e-5)
    assert jnp.allclose(l_only, l_ref, atol=1e-5, rtol=1e-5)

    print("KERNEL_OK")
</pallas_src>

<mosaic_0001>
module attributes {stable_mosaic.version = 11 : i64} {
  func.func @_ae_fused_kernel(%arg0: i32, %arg1: memref<2x9x256xf32, #tpu.memory_space<vmem>>, %arg2: memref<65x9xf32, #tpu.memory_space<vmem>>, %arg3: memref<8x65xf32, #tpu.memory_space<vmem>>, %arg4: memref<2x8x256xf32, #tpu.memory_space<vmem>>) attributes {dimension_semantics = [#tpu.dimension_semantics<parallel>], iteration_bounds = array<i64: 1>, scalar_prefetch = 0 : i64, scratch_operands = 0 : i64, tpu.core_type = #tpu.core_type<tc>, window_params = [{transform_indices = @transform_0, window_bounds = array<i64: 2, 9, 256>}, {pipeline_mode = #tpu.pipeline_mode<synchronous>, transform_indices = @transform_1, window_bounds = array<i64: 65, 9>}, {pipeline_mode = #tpu.pipeline_mode<synchronous>, transform_indices = @transform_2, window_bounds = array<i64: 8, 65>}, {transform_indices = @transform_3, window_bounds = array<i64: 2, 8, 256>}]} {
    %c0 = arith.constant 0 : index
    %c0_0 = arith.constant 0 : index
    %0 = vector.load %arg2[%c0, %c0_0] : memref<65x9xf32, #tpu.memory_space<vmem>>, vector<65x9xf32>
    %c0_1 = arith.constant 0 : index
    %c0_2 = arith.constant 0 : index
    %1 = vector.load %arg3[%c0_1, %c0_2] : memref<8x65xf32, #tpu.memory_space<vmem>>, vector<8x65xf32>
    %c0_3 = arith.constant 0 : index
    %c0_4 = arith.constant 0 : index
    %c0_5 = arith.constant 0 : index
    %2 = vector.load %arg1[%c0_3, %c0_4, %c0_5] : memref<2x9x256xf32, #tpu.memory_space<vmem>>, vector<1x9x256xf32>
    %3 = vector.shape_cast %2 : vector<1x9x256xf32> to vector<9x256xf32>
    %cst = arith.constant dense<0.000000e+00> : vector<65x256xf32>
    %4 = tpu.matmul %0, %3, %cst {dimension_numbers = #tpu.dot_dimension_numbers<[1], [0], [0], [1], [0, 0, 1, 1], [], []>} : vector<65x9xf32>, vector<9x256xf32>, vector<65x256xf32> -> vector<65x256xf32>
    %cst_6 = arith.constant 0.000000e+00 : f32
    %5 = vector.broadcast %cst_6 : f32 to vector<65x256xf32>
    %6 = arith.maximumf %4, %5 : vector<65x256xf32>
    %cst_7 = arith.constant dense<0.000000e+00> : vector<8x256xf32>
    %7 = tpu.matmul %1, %6, %cst_7 {dimension_numbers = #tpu.dot_dimension_numbers<[1], [0], [0], [1], [0, 0, 1, 1], [], []>} : vector<8x65xf32>, vector<65x256xf32>, vector<8x256xf32> -> vector<8x256xf32>
    %cst_8 = arith.constant 5.000000e-01 : f32
    %8 = vector.broadcast %cst_8 : f32 to vector<8x256xf32>
    %9 = arith.mulf %8, %7 : vector<8x256xf32>
    %10 = math.tanh %9 : vector<8x256xf32>
    %cst_9 = arith.constant 5.000000e-01 : f32
    %11 = vector.broadcast %cst_9 : f32 to vector<8x256xf32>
    %12 = arith.mulf %11, %10 : vector<8x256xf32>
    %cst_10 = arith.constant 5.000000e-01 : f32
    %13 = vector.broadcast %cst_10 : f32 to vector<8x256xf32>
    %14 = arith.addf %12, %13 : vector<8x256xf32>
    %c0_11 = arith.constant 0 : index
    %c0_12 = arith.constant 0 : index
    %c0_13 = arith.constant 0 : index
    %15 = vector.load %arg4[%c0_11, %c0_12, %c0_13] : memref<2x8x256xf32, #tpu.memory_space<vmem>>, vector<1x8x256xf32>
    %16 = vector.shape_cast %15 : vector<1x8x256xf32> to vector<8x256xf32>
    %17 = vector.shape_cast %14 : vector<8x256xf32> to vector<1x8x256xf32>
    tpu.vector_store %arg4[%c0_11, %c0_12, %c0_13], %17 {strides = array<i32>} : memref<2x8x256xf32, #tpu.memory_space<vmem>>, vector<1x8x256xf32>,
    %c1 = arith.constant 1 : index
    %c0_14 = arith.constant 0 : index
    %c0_15 = arith.constant 0 : index
    %18 = vector.load %arg1[%c1, %c0_14, %c0_15] : memref<2x9x256xf32, #tpu.memory_space<vmem>>, vector<1x9x256xf32>
    %19 = vector.shape_cast %18 : vector<1x9x256xf32> to vector<9x256xf32>
    %cst_16 = arith.constant dense<0.000000e+00> : vector<65x256xf32>
    %20 = tpu.matmul %0, %19, %cst_16 {dimension_numbers = #tpu.dot_dimension_numbers<[1], [0], [0], [1], [0, 0, 1, 1], [], []>} : vector<65x9xf32>, vector<9x256xf32>, vector<65x256xf32> -> vector<65x256xf32>
    %cst_17 = arith.constant 0.000000e+00 : f32
    %21 = vector.broadcast %cst_17 : f32 to vector<65x256xf32>
    %22 = arith.maximumf %20, %21 : vector<65x256xf32>
    %cst_18 = arith.constant dense<0.000000e+00> : vector<8x256xf32>
    %23 = tpu.matmul %1, %22, %cst_18 {dimension_numbers = #tpu.dot_dimension_numbers<[1], [0], [0], [1], [0, 0, 1, 1], [], []>} : vector<8x65xf32>, vector<65x256xf32>, vector<8x256xf32> -> vector<8x256xf32>
    %cst_19 = arith.constant 5.000000e-01 : f32
    %24 = vector.broadcast %cst_19 : f32 to vector<8x256xf32>
    %25 = arith.mulf %24, %23 : vector<8x256xf32>
    %26 = math.tanh %25 : vector<8x256xf32>
    %cst_20 = arith.constant 5.000000e-01 : f32
    %27 = vector.broadcast %cst_20 : f32 to vector<8x256xf32>
    %28 = arith.mulf %27, %26 : vector<8x256xf32>
    %cst_21 = arith.constant 5.000000e-01 : f32
    %29 = vector.broadcast %cst_21 : f32 to vector<8x256xf32>
    %30 = arith.addf %28, %29 : vector<8x256xf32>
    %c1_22 = arith.constant 1 : index
    %c0_23 = arith.constant 0 : index
    %c0_24 = arith.constant 0 : index
    %31 = vector.load %arg4[%c1_22, %c0_23, %c0_24] : memref<2x8x256xf32, #tpu.memory_space<vmem>>, vector<1x8x256xf32>
    %32 = vector.shape_cast %31 : vector<1x8x256xf32> to vector<8x256xf32>
    %33 = vector.shape_cast %30 : vector<8x256xf32> to vector<1x8x256xf32>
    tpu.vector_store %arg4[%c1_22, %c0_23, %c0_24], %33 {strides = array<i32>} : memref<2x8x256xf32, #tpu.memory_space<vmem>>, vector<1x8x256xf32>,
    return
  }
  func.func @transform_0(%arg0: i32) -> (i32, i32, i32) {
    %c0_i32 = arith.constant 0 : i32
    %c0_i32_0 = arith.constant 0 : i32
    %c0_i32_1 = arith.constant 0 : i32
    return %arg0, %c0_i32, %c0_i32_0 : i32, i32, i32
  }
  func.func @transform_1(%arg0: i32) -> (i32, i32) {
    %c0_i32 = arith.constant 0 : i32
    %c0_i32_0 = arith.constant 0 : i32
    %c0_i32_1 = arith.constant 0 : i32
    return %c0_i32, %c0_i32_0 : i32, i32
  }
  func.func @transform_2(%arg0: i32) -> (i32, i32) {
    %c0_i32 = arith.constant 0 : i32
    %c0_i32_0 = arith.constant 0 : i32
    %c0_i32_1 = arith.constant 0 : i32
    return %c0_i32, %c0_i32_0 : i32, i32
  }
  func.func @transform_3(%arg0: i32) -> (i32, i32, i32) {
    %c0_i32 = arith.constant 0 : i32
    %c0_i32_0 = arith.constant 0 : i32
    %c0_i32_1 = arith.constant 0 : i32
    return %arg0, %c0_i32, %c0_i32_0 : i32, i32, i32
  }
}

</mosaic_0001>

<llo_original>
// kernel: tpu_custom_call.1
$region0: #{tpu_custom_call.1}
  #allocation0 [shape = 'u32[]', space=smem, size = 0x4, offset = 0x4, fixed_abs, tag = 'smem constant byte address 0x4 - core index']
  #allocation1 [shape = 'u32[144,128]{1,0:T(1,128)}', space=vmem, size = 0x12000, scoped, tag = 'internal scratch']
  %s0 = inlined_call_operand.vmem [shape: f32[2,9,256], index: 0, kind: input, shape index: {}]
  %s1 = inlined_call_operand.vmem [shape: f32[65,9], index: 1, kind: input, shape index: {}]
  %s2 = inlined_call_operand.vmem [shape: f32[8,65], index: 2, kind: input, shape index: {}]
  %s3 = inlined_call_operand.hbm [shape: f32[2,8,256], index: 3, kind: output, shape index: {}]
  %s4 = sld [smem:[#allocation0]]
  $region22: #{tpu_custom_call.1} parent=0
    _
  %s6 = ssub.s32 1, %s4
  %s7 = scalar_select 0, %s6, %s4
  $region1: #{tpu_custom_call.1} parent=0
    #allocation2 [shape = 'u8[16384]{0}', space=vmem, size = 0x4000, scoped, tag = 'output window, operand 0, single buffered']
    #allocation3 [shape = 's32[1]{0}', space=sflag, size = 0x4, scoped, tag = 'scoped memory for tpu_custom_call.1']
    %8 = vsyncpa [#allocation3], 0
    // Predicated region
    $region2: #{tpu_custom_call.1} parent=1 // pred_check
      _
    $region3: #{tpu_custom_call.1} parent=1 // pred_check_branch
      %10 = sbr.rel (0) target = $region5
    $region4: #{tpu_custom_call.1} parent=1 // pred_region
      _
    $region5: #{tpu_custom_call.1} parent=1 // pred_fallthru
      _
    // Predicated region
    $region6: #{tpu_custom_call.1} parent=1 // pred_check
      _
    $region7: #{tpu_custom_call.1} parent=1 // pred_check_branch
      %12 = sbr.rel (0) target = $region9
    $region8: #{tpu_custom_call.1} parent=1 // pred_region
      _
    $region9: #{tpu_custom_call.1} parent=1 // pred_fallthru
      _
    // Predicated region
    $region10: #{tpu_custom_call.1} parent=1 // pred_check
      _
    $region11: #{tpu_custom_call.1} parent=1 // pred_check_branch
      %14 = sbr.rel (0) target = $region13
    $region12: #{tpu_custom_call.1} parent=1 // pred_region
      _
    $region13: #{tpu_custom_call.1} parent=1 // pred_fallthru
      _
    %v15 = vld [vmem:[%s1] sm:$0xff]
    %v16 = vld [vmem:[%s1 + $0x8] sm:$0xff]
    %v17 = vld [vmem:[%s1 + $0x10] sm:$0xff]
    %v18 = vld [vmem:[%s1 + $0x18] sm:$0xff]
    %v19 = vld [vmem:[%s1 + $0x20] sm:$0xff]
    %v20 = vld [vmem:[%s1 + $0x28] sm:$0xff]
    %v21 = vld [vmem:[%s1 + $0x30] sm:$0xff]
    %v22 = vld [vmem:[%s1 + $0x38] sm:$0xff]
    %v23 = vld [vmem:[%s1 + $0x40] sm:$0x1]
    %v24 = vld [vmem:[%s2] sm:$0xff]
    %v25 = vld [vmem:[%s0] sm:$0xff]
    %v26 = vld [vmem:[%s0 + $0x8] sm:$0xff]
    %v27 = vld [vmem:[%s0 + $0x10] sm:$0x1]
    %v28 = vld [vmem:[%s0 + $0x18] sm:$0x1]
    %vm29 = vcmask 72704
    %v31 = vsel %vm29, %v15, 0
    %v34 = vsel %vm29, %v16, 0
    %v37 = vsel %vm29, %v17, 0
    %v40 = vsel %vm29, %v18, 0
    %v43 = vsel %vm29, %v19, 0
    %v46 = vsel %vm29, %v20, 0
    %v49 = vsel %vm29, %v21, 0
    %v52 = vsel %vm29, %v22, 0
    %v55 = vsel %vm29, %v23, 0
    %vm57 = vcmask 1040384
    %v59 = vsel %vm57, %v27, 0
    %v62 = vsel %vm57, %v28, 0
    %64 = vmatprep.subr.mxu0 %v26
    %65 = vmatpush1.msra.mxu0 %v25
    %66 = vmatprep.subr.mxu0 %v62
    %67 = vmatpush1.msra.mxu0 %v59
    %68 = vmatprep.subr.mxu0 0.0
    %69 = vmatpush1.msra.mxu0 0.0
    %70 = vmatprep.subr.mxu0 0.0
    %71 = vmatpush1.msra.mxu0 0.0
    %72 = vmatprep.subr.mxu0 0.0
    %73 = vmatpush1.msra.mxu0 0.0
    %74 = vmatprep.subr.mxu0 0.0
    %75 = vmatpush1.msra.mxu0 0.0
    %76 = vmatprep.subr.mxu0 0.0
    %77 = vmatpush1.msra.mxu0 0.0
    %78 = vmatprep.subr.mxu0 0.0
    %79 = vmatpush1.msra.mxu0 0.0
    %80 = vmatprep.subr.mxu0 0.0
    %81 = vmatpush1.msra.mxu0 0.0
    %82 = vmatprep.subr.mxu0 0.0
    %83 = vmatpush1.msra.mxu0 0.0
    %84 = vmatprep.subr.mxu0 0.0
    %85 = vmatpush1.msra.mxu0 0.0
    %86 = vmatprep.subr.mxu0 0.0
    %87 = vmatpush1.msra.mxu0 0.0
    %88 = vmatprep.subr.mxu0 0.0
    %89 = vmatpush1.msra.mxu0 0.0
    %90 = vmatprep.subr.mxu0 0.0
    %91 = vmatpush1.msra.mxu0 0.0
    %92 = vmatprep.subr.mxu0 0.0
    %93 = vmatpush1.msra.mxu0 0.0
    %94 = vmatprep.subr.mxu0 0.0
    %95 = vmatpush1.msra.mxu0 0.0
    %96 = vmatprep.subr.mxu0 0.0
    %97 = vmatpush1.msra.mxu0 0.0
    %98 = vmatprep.subr.mxu0 0.0
    %99 = vmatpush1.msra.mxu0 0.0
    %100 = vmatprep.subr.mxu0 0.0
    %101 = vmatpush1.msra.mxu0 0.0
    %102 = vmatprep.subr.mxu0 0.0
    %103 = vmatpush1.msra.mxu0 0.0
    %104 = vmatprep.subr.mxu0 0.0
    %105 = vmatpush1.msra.mxu0 0.0
    %106 = vmatprep.subr.mxu0 0.0
    %107 = vmatpush1.msra.mxu0 0.0
    %108 = vmatprep.subr.mxu0 0.0
    %109 = vmatpush1.msra.mxu0 0.0
    %110 = vmatprep.subr.mxu0 0.0
    %111 = vmatpush1.msra.mxu0 0.0
    %112 = vmatprep.subr.mxu0 0.0
    %113 = vmatpush1.msra.mxu0 0.0
    %114 = vmatprep.subr.mxu0 0.0
    %115 = vmatpush1.msra.mxu0 0.0
    %116 = vmatprep.subr.mxu0 0.0
    %117 = vmatpush1.msra.mxu0 0.0
    %118 = vmatprep.subr.mxu0 0.0
    %119 = vmatpush1.msra.mxu0 0.0
    %120 = vmatprep.subr.mxu0 0.0
    %121 = vmatpush1.msra.mxu0 0.0
    %122 = vmatprep.subr.mxu0 0.0
    %123 = vmatpush1.msra.mxu0 0.0
    %124 = vmatprep.subr.mxu0 0.0
    %125 = vmatpush1.msra.mxu0 0.0
    %126 = vmatprep.subr.mxu0 0.0
    %127 = vmatpush1.msra.mxu0 0.0
    %128 = vmatprep.mubr.f32.mxu0 0.0
    %129 = vmatmul.mubr.f32.gmra.mrb[0].mxu0 %v31
    %v130 = vpop.f32.mrb[0].mxu0
    %v131 = vadd.f32 0.0, %v130
    %v132 = vpop.f32.mrb[0].mxu0
    %v133 = vadd.f32 0.0, %v132
    %134 = vmatprep.mubr.f32.mxu0 0.0
    %135 = vmatmul.mubr.f32.gmra.mrb[0].mxu0 %v34
    %v136 = vpop.f32.mrb[0].mxu0
    %v137 = vadd.f32 0.0, %v136
    %v138 = vpop.f32.mrb[0].mxu0
    %v139 = vadd.f32 0.0, %v138
    %140 = vmatprep.mubr.f32.mxu0 0.0
    %141 = vmatmul.mubr.f32.gmra.mrb[0].mxu0 %v37
    %v142 = vpop.f32.mrb[0].mxu0
    %v143 = vadd.f32 0.0, %v142
    %v144 = vpop.f32.mrb[0].mxu0
    %v145 = vadd.f32 0.0, %v144
    %146 = vmatprep.mubr.f32.mxu0 0.0
    %147 = vmatmul.mubr.f32.gmra.mrb[0].mxu0 %v40
    %v148 = vpop.f32.mrb[0].mxu0
    %v149 = vadd.f32 0.0, %v148
    %v150 = vpop.f32.mrb[0].mxu0
    %v151 = vadd.f32 0.0, %v150
    %152 = vmatprep.mubr.f32.mxu0 0.0
    %153 = vmatmul.mubr.f32.gmra.mrb[0].mxu0 %v43
    %v154 = vpop.f32.mrb[0].mxu0
    %v155 = vadd.f32 0.0, %v154
    %v156 = vpop.f32.mrb[0].mxu0
    %v157 = vadd.f32 0.0, %v156
    %158 = vmatprep.mubr.f32.mxu0 0.0
    %159 = vmatmul.mubr.f32.gmra.mrb[0].mxu0 %v46
    %v160 = vpop.f32.mrb[0].mxu0
    %v161 = vadd.f32 0.0, %v160
    %v162 = vpop.f32.mrb[0].mxu0
    %v163 = vadd.f32 0.0, %v162
    %164 = vmatprep.mubr.f32.mxu0 0.0
    %165 = vmatmul.mubr.f32.gmra.mrb[0].mxu0 %v49
    %v166 = vpop.f32.mrb[0].mxu0
    %v167 = vadd.f32 0.0, %v166
    %v168 = vpop.f32.mrb[0].mxu0
    %v169 = vadd.f32 0.0, %v168
    %170 = vmatprep.mubr.f32.mxu0 0.0
    %171 = vmatmul.mubr.f32.gmra.mrb[0].mxu0 %v52
    %v172 = vpop.f32.mrb[0].mxu0
    %v173 = vadd.f32 0.0, %v172
    %v174 = vpop.f32.mrb[0].mxu0
    %v175 = vadd.f32 0.0, %v174
    %176 = vmatprep.mubr.f32.mxu0 0.0
    %177 = vmatmul.mubr.f32.gmra.mrb[0].mxu0 %v55
    %v178 = vpop.f32.mrb[0].mxu0
    %v179 = vadd.f32 0.0, %v178
    %v180 = vpop.f32.mrb[0].mxu0
    %v181 = vadd.f32 0.0, %v180
    %182 = vdwg.mxu0
    %v183 = vmax.f32 %v131, 0.0
    %v184 = vmax.f32 %v133, 0.0
    %v185 = vmax.f32 %v137, 0.0
    %v186 = vmax.f32 %v139, 0.0
    %v187 = vmax.f32 %v143, 0.0
    %v188 = vmax.f32 %v145, 0.0
    %v189 = vmax.f32 %v149, 0.0
    %v190 = vmax.f32 %v151, 0.0
    %v191 = vmax.f32 %v155, 0.0
    %v192 = vmax.f32 %v157, 0.0
    %v193 = vmax.f32 %v161, 0.0
    %v194 = vmax.f32 %v163, 0.0
    %v195 = vmax.f32 %v167, 0.0
    %v196 = vmax.f32 %v169, 0.0
    %v197 = vmax.f32 %v173, 0.0
    %v198 = vmax.f32 %v175, 0.0
    %v199 = vmax.f32 %v179, 0.0
    %v200 = vmax.f32 %v181, 0.0
    %vm201 = vcmask 531456
    %v203 = vsel %vm201, %v24, 0
    %v206 = vsel %vm57, %v199, 0
    %v209 = vsel %vm57, %v200, 0
    %211 = vmatprep.subr.mxu0 %v184
    %212 = vmatpush1.msra.mxu0 %v183
    %213 = vmatprep.subr.mxu0 %v186
    %214 = vmatpush1.msra.mxu0 %v185
    %215 = vmatprep.subr.mxu0 %v188
    %216 = vmatpush1.msra.mxu0 %v187
    %217 = vmatprep.subr.mxu0 %v190
    %218 = vmatpush1.msra.mxu0 %v189
    %219 = vmatprep.subr.mxu0 %v192
    %220 = vmatpush1.msra.mxu0 %v191
    %221 = vmatprep.subr.mxu0 %v194
    %222 = vmatpush1.msra.mxu0 %v193
    %223 = vmatprep.subr.mxu0 %v196
    %224 = vmatpush1.msra.mxu0 %v195
    %225 = vmatprep.subr.mxu0 %v198
    %226 = vmatpush1.msra.mxu0 %v197
    %227 = vmatprep.subr.mxu0 %v209
    %228 = vmatpush1.msra.mxu0 %v206
    %229 = vmatprep.subr.mxu0 0.0
    %230 = vmatpush1.msra.mxu0 0.0
    %231 = vmatprep.subr.mxu0 0.0
    %232 = vmatpush1.msra.mxu0 0.0
    %233 = vmatprep.subr.mxu0 0.0
    %234 = vmatpush1.msra.mxu0 0.0
    %235 = vmatprep.subr.mxu0 0.0
    %236 = vmatpush1.msra.mxu0 0.0
    %237 = vmatprep.subr.mxu0 0.0
    %238 = vmatpush1.msra.mxu0 0.0
    %239 = vmatprep.subr.mxu0 0.0
    %240 = vmatpush1.msra.mxu0 0.0
    %241 = vmatprep.subr.mxu0 0.0
    %242 = vmatpush1.msra.mxu0 0.0
    %243 = vmatprep.subr.mxu0 0.0
    %244 = vmatpush1.msra.mxu0 0.0
    %245 = vmatprep.subr.mxu0 0.0
    %246 = vmatpush1.msra.mxu0 0.0
    %247 = vmatprep.subr.mxu0 0.0
    %248 = vmatpush1.msra.mxu0 0.0
    %249 = vmatprep.subr.mxu0 0.0
    %250 = vmatpush1.msra.mxu0 0.0
    %251 = vmatprep.subr.mxu0 0.0
    %252 = vmatpush1.msra.mxu0 0.0
    %253 = vmatprep.subr.mxu0 0.0
    %254 = vmatpush1.msra.mxu0 0.0
    %255 = vmatprep.subr.mxu0 0.0
    %256 = vmatpush1.msra.mxu0 0.0
    %257 = vmatprep.subr.mxu0 0.0
    %258 = vmatpush1.msra.mxu0 0.0
    %259 = vmatprep.subr.mxu0 0.0
    %260 = vmatpush1.msra.mxu0 0.0
    %261 = vmatprep.subr.mxu0 0.0
    %262 = vmatpush1.msra.mxu0 0.0
    %263 = vmatprep.subr.mxu0 0.0
    %264 = vmatpush1.msra.mxu0 0.0
    %265 = vmatprep.subr.mxu0 0.0
    %266 = vmatpush1.msra.mxu0 0.0
    %267 = vmatprep.subr.mxu0 0.0
    %268 = vmatpush1.msra.mxu0 0.0
    %269 = vmatprep.subr.mxu0 0.0
    %270 = vmatpush1.msra.mxu0 0.0
    %271 = vmatprep.subr.mxu0 0.0
    %272 = vmatpush1.msra.mxu0 0.0
    %273 = vmatprep.subr.mxu0 0.0
    %274 = vmatpush1.msra.mxu0 0.0
    %275 = vmatprep.mubr.f32.mxu0 0.0
    %276 = vmatmul.mubr.f32.gmra.mrb[0].mxu0 %v203
    %v277 = vpop.f32.mrb[0].mxu0
    %v278 = vadd.f32 0.0, %v277
    %v279 = vpop.f32.mrb[0].mxu0
    %v280 = vadd.f32 0.0, %v279
    %281 = vdwg.mxu0
    %v282 = vmul.f32 %v278, 0.5
    %v283 = vmul.f32 %v280, 0.5
    %v284 = vtanh.pop %v282
    %v285 = vtanh.pop %v283
    %v286 = vmul.f32 %v284, 0.5
    %v287 = vmul.f32 %v285, 0.5
    %v288 = vadd.f32 %v286, 0.5
    %v289 = vadd.f32 %v287, 0.5
    %290 = vst [vmem:[#allocation2] sm:$0xff] %v288
    %291 = vst [vmem:[#allocation2 + $0x8] sm:$0xff] %v289
    %s292 = scalar_lea.vmem %s0, 32
    %v293 = vld [vmem:[%s292] sm:$0xff]
    %v294 = vld [vmem:[%s292 + $0x8] sm:$0xff]
    %v295 = vld [vmem:[%s292 + $0x10] sm:$0x1]
    %v296 = vld [vmem:[%s292 + $0x18] sm:$0x1]
    %v298 = vsel %vm57, %v295, 0
    %v301 = vsel %vm57, %v296, 0
    %303 = vmatprep.subr.mxu0 %v294
    %304 = vmatpush1.msra.mxu0 %v293
    %305 = vmatprep.subr.mxu0 %v301
    %306 = vmatpush1.msra.mxu0 %v298
    %307 = vmatprep.subr.mxu0 0.0
    %308 = vmatpush1.msra.mxu0 0.0
    %309 = vmatprep.subr.mxu0 0.0
    %310 = vmatpush1.msra.mxu0 0.0
    %311 = vmatprep.subr.mxu0 0.0
    %312 = vmatpush1.msra.mxu0 0.0
    %313 = vmatprep.subr.mxu0 0.0
    %314 = vmatpush1.msra.mxu0 0.0
    %315 = vmatprep.subr.mxu0 0.0
    %316 = vmatpush1.msra.mxu0 0.0
    %317 = vmatprep.subr.mxu0 0.0
    %318 = vmatpush1.msra.mxu0 0.0
    %319 = vmatprep.subr.mxu0 0.0
    %320 = vmatpush1.msra.mxu0 0.0
    %321 = vmatprep.subr.mxu0 0.0
    %322 = vmatpush1.msra.mxu0 0.0
    %323 = vmatprep.subr.mxu0 0.0
    %324 = vmatpush1.msra.mxu0 0.0
    %325 = vmatprep.subr.mxu0 0.0
    %326 = vmatpush1.msra.mxu0 0.0
    %327 = vmatprep.subr.mxu0 0.0
    %328 = vmatpush1.msra.mxu0 0.0
    %329 = vmatprep.subr.mxu0 0.0
    %330 = vmatpush1.msra.mxu0 0.0
    %331 = vmatprep.subr.mxu0 0.0
    %332 = vmatpush1.msra.mxu0 0.0
    %333 = vmatprep.subr.mxu0 0.0
    %334 = vmatpush1.msra.mxu0 0.0
    %335 = vmatprep.subr.mxu0 0.0
    %336 = vmatpush1.msra.mxu0 0.0
    %337 = vmatprep.subr.mxu0 0.0
    %338 = vmatpush1.msra.mxu0 0.0
    %339 = vmatprep.subr.mxu0 0.0
    %340 = vmatpush1.msra.mxu0 0.0
    %341 = vmatprep.subr.mxu0 0.0
    %342 = vmatpush1.msra.mxu0 0.0
    %343 = vmatprep.subr.mxu0 0.0
    %344 = vmatpush1.msra.mxu0 0.0
    %345 = vmatprep.subr.mxu0 0.0
    %346 = vmatpush1.msra.mxu0 0.0
    %347 = vmatprep.subr.mxu0 0.0
    %348 = vmatpush1.msra.mxu0 0.0
    %349 = vmatprep.subr.mxu0 0.0
    %350 = vmatpush1.msra.mxu0 0.0
    %351 = vmatprep.subr.mxu0 0.0
    %352 = vmatpush1.msra.mxu0 0.0
    %353 = vmatprep.subr.mxu0 0.0
    %354 = vmatpush1.msra.mxu0 0.0
    %355 = vmatprep.subr.mxu0 0.0
    %356 = vmatpush1.msra.mxu0 0.0
    %357 = vmatprep.subr.mxu0 0.0
    %358 = vmatpush1.msra.mxu0 0.0
    %359 = vmatprep.subr.mxu0 0.0
    %360 = vmatpush1.msra.mxu0 0.0
    %361 = vmatprep.subr.mxu0 0.0
    %362 = vmatpush1.msra.mxu0 0.0
    %363 = vmatprep.subr.mxu0 0.0
    %364 = vmatpush1.msra.mxu0 0.0
    %365 = vmatprep.subr.mxu0 0.0
    %366 = vmatpush1.msra.mxu0 0.0
    %367 = vmatprep.mubr.f32.mxu0 0.0
    %368 = vmatmul.mubr.f32.gmra.mrb[0].mxu0 %v31
    %v369 = vpop.f32.mrb[0].mxu0
    %v370 = vadd.f32 0.0, %v369
    %v371 = vpop.f32.mrb[0].mxu0
    %v372 = vadd.f32 0.0, %v371
    %373 = vmatprep.mubr.f32.mxu0 0.0
    %374 = vmatmul.mubr.f32.gmra.mrb[0].mxu0 %v34
    %v375 = vpop.f32.mrb[0].mxu0
    %v376 = vadd.f32 0.0, %v375
    %v377 = vpop.f32.mrb[0].mxu0
    %v378 = vadd.f32 0.0, %v377
    %379 = vmatprep.mubr.f32.mxu0 0.0
    %380 = vmatmul.mubr.f32.gmra.mrb[0].mxu0 %v37
    %v381 = vpop.f32.mrb[0].mxu0
    %v382 = vadd.f32 0.0, %v381
    %v383 = vpop.f32.mrb[0].mxu0
    %v384 = vadd.f32 0.0, %v383
    %385 = vmatprep.mubr.f32.mxu0 0.0
    %386 = vmatmul.mubr.f32.gmra.mrb[0].mxu0 %v40
    %v387 = vpop.f32.mrb[0].mxu0
    %v388 = vadd.f32 0.0, %v387
    %v389 = vpop.f32.mrb[0].mxu0
    %v390 = vadd.f32 0.0, %v389
    %391 = vmatprep.mubr.f32.mxu0 0.0
    %392 = vmatmul.mubr.f32.gmra.mrb[0].mxu0 %v43
    %v393 = vpop.f32.mrb[0].mxu0
    %v394 = vadd.f32 0.0, %v393
    %v395 = vpop.f32.mrb[0].mxu0
    %v396 = vadd.f32 0.0, %v395
    %397 = vmatprep.mubr.f32.mxu0 0.0
    %398 = vmatmul.mubr.f32.gmra.mrb[0].mxu0 %v46
    %v399 = vpop.f32.mrb[0].mxu0
    %v400 = vadd.f32 0.0, %v399
    %v401 = vpop.f32.mrb[0].mxu0
    %v402 = vadd.f32 0.0, %v401
    %403 = vmatprep.mubr.f32.mxu0 0.0
    %404 = vmatmul.mubr.f32.gmra.mrb[0].mxu0 %v49
    %v405 = vpop.f32.mrb[0].mxu0
    %v406 = vadd.f32 0.0, %v405
    %v407 = vpop.f32.mrb[0].mxu0
    %v408 = vadd.f32 0.0, %v407
    %409 = vmatprep.mubr.f32.mxu0 0.0
    %410 = vmatmul.mubr.f32.gmra.mrb[0].mxu0 %v52
    %v411 = vpop.f32.mrb[0].mxu0
    %v412 = vadd.f32 0.0, %v411
    %v413 = vpop.f32.mrb[0].mxu0
    %v414 = vadd.f32 0.0, %v413
    %415 = vmatprep.mubr.f32.mxu0 0.0
    %416 = vmatmul.mubr.f32.gmra.mrb[0].mxu0 %v55
    %v417 = vpop.f32.mrb[0].mxu0
    %v418 = vadd.f32 0.0, %v417
    %v419 = vpop.f32.mrb[0].mxu0
    %v420 = vadd.f32 0.0, %v419
    %421 = vdwg.mxu0
    %v422 = vmax.f32 %v370, 0.0
    %v423 = vmax.f32 %v372, 0.0
    %v424 = vmax.f32 %v376, 0.0
    %v425 = vmax.f32 %v378, 0.0
    %v426 = vmax.f32 %v382, 0.0
    %v427 = vmax.f32 %v384, 0.0
    %v428 = vmax.f32 %v388, 0.0
    %v429 = vmax.f32 %v390, 0.0
    %v430 = vmax.f32 %v394, 0.0
    %v431 = vmax.f32 %v396, 0.0
    %v432 = vmax.f32 %v400, 0.0
    %v433 = vmax.f32 %v402, 0.0
    %v434 = vmax.f32 %v406, 0.0
    %v435 = vmax.f32 %v408, 0.0
    %v436 = vmax.f32 %v412, 0.0
    %v437 = vmax.f32 %v414, 0.0
    %v438 = vmax.f32 %v418, 0.0
    %v439 = vmax.f32 %v420, 0.0
    %v441 = vsel %vm57, %v438, 0
    %v444 = vsel %vm57, %v439, 0
    %446 = vmatprep.subr.mxu0 %v423
    %447 = vmatpush1.msra.mxu0 %v422
    %448 = vmatprep.subr.mxu0 %v425
    %449 = vmatpush1.msra.mxu0 %v424
    %450 = vmatprep.subr.mxu0 %v427
    %451 = vmatpush1.msra.mxu0 %v426
    %452 = vmatprep.subr.mxu0 %v429
    %453 = vmatpush1.msra.mxu0 %v428
    %454 = vmatprep.subr.mxu0 %v431
    %455 = vmatpush1.msra.mxu0 %v430
    %456 = vmatprep.subr.mxu0 %v433
    %457 = vmatpush1.msra.mxu0 %v432
    %458 = vmatprep.subr.mxu0 %v435
    %459 = vmatpush1.msra.mxu0 %v434
    %460 = vmatprep.subr.mxu0 %v437
    %461 = vmatpush1.msra.mxu0 %v436
    %462 = vmatprep.subr.mxu0 %v444
    %463 = vmatpush1.msra.mxu0 %v441
    %464 = vmatprep.subr.mxu0 0.0
    %465 = vmatpush1.msra.mxu0 0.0
    %466 = vmatprep.subr.mxu0 0.0
    %467 = vmatpush1.msra.mxu0 0.0
    %468 = vmatprep.subr.mxu0 0.0
    %469 = vmatpush1.msra.mxu0 0.0
    %470 = vmatprep.subr.mxu0 0.0
    %471 = vmatpush1.msra.mxu0 0.0
    %472 = vmatprep.subr.mxu0 0.0
    %473 = vmatpush1.msra.mxu0 0.0
    %474 = vmatprep.subr.mxu0 0.0
    %475 = vmatpush1.msra.mxu0 0.0
    %476 = vmatprep.subr.mxu0 0.0
    %477 = vmatpush1.msra.mxu0 0.0
    %478 = vmatprep.subr.mxu0 0.0
    %479 = vmatpush1.msra.mxu0 0.0
    %480 = vmatprep.subr.mxu0 0.0
    %481 = vmatpush1.msra.mxu0 0.0
    %482 = vmatprep.subr.mxu0 0.0
    %483 = vmatpush1.msra.mxu0 0.0
    %484 = vmatprep.subr.mxu0 0.0
    %485 = vmatpush1.msra.mxu0 0.0
    %486 = vmatprep.subr.mxu0 0.0
    %487 = vmatpush1.msra.mxu0 0.0
    %488 = vmatprep.subr.mxu0 0.0
    %489 = vmatpush1.msra.mxu0 0.0
    %490 = vmatprep.subr.mxu0 0.0
    %491 = vmatpush1.msra.mxu0 0.0
    %492 = vmatprep.subr.mxu0 0.0
    %493 = vmatpush1.msra.mxu0 0.0
    %494 = vmatprep.subr.mxu0 0.0
    %495 = vmatpush1.msra.mxu0 0.0
    %496 = vmatprep.subr.mxu0 0.0
    %497 = vmatpush1.msra.mxu0 0.0
    %498 = vmatprep.subr.mxu0 0.0
    %499 = vmatpush1.msra.mxu0 0.0
    %500 = vmatprep.subr.mxu0 0.0
    %501 = vmatpush1.msra.mxu0 0.0
    %502 = vmatprep.subr.mxu0 0.0
    %503 = vmatpush1.msra.mxu0 0.0
    %504 = vmatprep.subr.mxu0 0.0
    %505 = vmatpush1.msra.mxu0 0.0
    %506 = vmatprep.subr.mxu0 0.0
    %507 = vmatpush1.msra.mxu0 0.0
    %508 = vmatprep.subr.mxu0 0.0
    %509 = vmatpush1.msra.mxu0 0.0
    %510 = vmatprep.mubr.f32.mxu0 0.0
    %511 = vmatmul.mubr.f32.gmra.mrb[0].mxu0 %v203
    %v512 = vpop.f32.mrb[0].mxu0
    %v513 = vadd.f32 0.0, %v512
    %v514 = vpop.f32.mrb[0].mxu0
    %v515 = vadd.f32 0.0, %v514
    %516 = vdwg.mxu0
    %v517 = vmul.f32 %v513, 0.5
    %v518 = vmul.f32 %v515, 0.5
    %v519 = vtanh.pop %v517
    %v520 = vtanh.pop %v518
    %v521 = vmul.f32 %v519, 0.5
    %v522 = vmul.f32 %v520, 0.5
    %v523 = vadd.f32 %v521, 0.5
    %v524 = vadd.f32 %v522, 0.5
    %s525 = scalar_lea.vmem [#allocation2], 16
    %526 = vst [vmem:[%s525] sm:$0xff] %v523
    %527 = vst [vmem:[%s525 + $0x8] sm:$0xff] %v524
    // Predicated region
    $region14: #{tpu_custom_call.1} parent=1 // pred_check
      _
    $region15: #{tpu_custom_call.1} parent=1 // pred_check_branch
      %529 = sbr.rel (0) target = $region17
    $region16: #{tpu_custom_call.1} parent=1 // pred_region
      %s531 = ssub.s32 512, 512
      %532 = vsyncadd [#allocation3], %s531
      %s533 = sshll.u32 [#allocation2], 4
      %s534 = int_to_ptr.vmem [resolvable:$true] %s533
      %539 = dma.vmem_to_hbm [thread:$0]  %s534, 512, %s3, [#allocation3], 256, 256, 16
    $region17: #{tpu_custom_call.1} parent=1 // pred_fallthru
      _
    // Predicated region
    $region18: #{tpu_custom_call.1} parent=1 // pred_check
      _
    $region19: #{tpu_custom_call.1} parent=1 // pred_check_branch
      %541 = sbr.rel (0) target = $region21
    $region20: #{tpu_custom_call.1} parent=1 // pred_region
      %542 = dma.done [#allocation3], 512
    $region21: #{tpu_custom_call.1} parent=1 // pred_fallthru
      _
    %543 = vsyncpa [#allocation3], 1

</llo_original>
